<compile_context>
chip_gen: v5e
topology: v5e:2x2
jax: 0.10.0
libtpu: 0.0.40
codegen_flags: <defaults>
</compile_context>

<pallas_src>
import functools

import jax
import jax.numpy as jnp
from jax.experimental import pallas as pl
from jax.experimental.pallas import tpu as pltpu


def _round_up(a, m):
    return ((a + m - 1) // m) * m


def _nmse_kernel(x_hat_ref, x_ref, out_ref, power_acc, mse_acc, *,
                 batch, w_tile, b_rem, w_rem):
    """Grid = (row blocks [parallel], width chunks [arbitrary, innermost])."""
    i = pl.program_id(0)            # row-block index
    j = pl.program_id(1)            # width-chunk index (reduction axis)
    n_w = pl.num_programs(1)
    tb = x_ref.shape[0]

    @pl.when(j == 0)
    def _():
        power_acc[...] = jnp.zeros_like(power_acc)
        mse_acc[...] = jnp.zeros_like(mse_acc)

    x = x_ref[...].astype(jnp.float32)          # (tb, w_tile)
    x_hat = x_hat_ref[...].astype(jnp.float32)  # (tb, w_tile)

    x_c = x - 0.5          # centered x (power term only)
    diff = x - x_hat       # (x-0.5) - (x_hat-0.5) == x - x_hat

    if w_rem != 0:
        # Ragged last width chunk: zero the out-of-bounds columns so the partial
        # sums ignore whatever garbage the padded block read contains.
        limit = jnp.where(j == n_w - 1, w_rem, w_tile)
        col = jax.lax.broadcasted_iota(jnp.int32, x.shape, 1)
        valid = col < limit
        x_c = jnp.where(valid, x_c, 0.0)
        diff = jnp.where(valid, diff, 0.0)

    power_acc[...] += jnp.sum(x_c * x_c, axis=-1, keepdims=True)   # (tb, 1)
    mse_acc[...] += jnp.sum(diff * diff, axis=-1, keepdims=True)   # (tb, 1)

    @pl.when(j == n_w - 1)
    def _():
        nmse = mse_acc[...] / power_acc[...]
        if b_rem != 0:
            # Ragged last row block: garbage rows may have power == 0 -> inf/NaN;
            # the select drops them (and the partial output writeback never stores
            # those rows anyway).
            row = i * tb + jax.lax.broadcasted_iota(jnp.int32, (tb, 1), 0)
            nmse = jnp.where(row < batch, nmse, 0.0)
        out_ref[...] = nmse


def nmse_loss(x_hat, x, reduction="sum", *, target_block_bytes=4 * 1024 * 1024):
    """Pallas TPU implementation of NMSELoss.forward(x_hat, x)."""
    assert x.shape == x_hat.shape
    B, C, H, W = x.shape
    assert C == 2, "expects real/imag channel pair"
    width = 2 * H * W

    # Glue: flatten each NCHW sample to one contiguous lane-dense row (real||imag).
    x_f = x.reshape(B, width)
    x_hat_f = x_hat.reshape(B, width)

    itemsize = jnp.dtype(x.dtype).itemsize
    row_mult = max(8, 32 // max(itemsize, 1))   # sublane multiple: 8 f32 / 16 bf16

    # ~4 MiB per input block; 2 inputs x 2 pipeline buffers ~= 16 MiB, well inside
    # the 32 MiB scoped-VMEM limit on every generation (incl. v7x's 64 MiB VMEM).
    block_elems = max(1, target_block_bytes // itemsize)
    max_w_per_row = max(1, block_elems // row_mult)

    if width <= max_w_per_row:
        w_tile = width                                 # full width: one reduction step
    else:
        w_tile = max(128, (max_w_per_row // 128) * 128)

    tb = max(row_mult, (block_elems // w_tile // row_mult) * row_mult)
    tb = min(tb, _round_up(B, row_mult))

    num_row_blocks = pl.cdiv(B, tb)
    num_w_blocks = pl.cdiv(width, w_tile)
    b_rem = B % tb
    w_rem = width % w_tile

    per_row_nmse = pl.pallas_call(
        functools.partial(_nmse_kernel, batch=B, w_tile=w_tile,
                          b_rem=b_rem, w_rem=w_rem),
        out_shape=jax.ShapeDtypeStruct((B, 1), jnp.float32),
        grid_spec=pltpu.PrefetchScalarGridSpec(
            num_scalar_prefetch=0,
            grid=(num_row_blocks, num_w_blocks),
            in_specs=[
                pl.BlockSpec((tb, w_tile), lambda i, j: (i, j)),
                pl.BlockSpec((tb, w_tile), lambda i, j: (i, j)),
            ],
            out_specs=pl.BlockSpec((tb, 1), lambda i, j: (i, 0)),
            scratch_shapes=[
                pltpu.VMEM((tb, 1), jnp.float32),   # power accumulator
                pltpu.VMEM((tb, 1), jnp.float32),   # mse accumulator
            ],
        ),
        compiler_params=pltpu.CompilerParams(
            dimension_semantics=("parallel", "arbitrary"),
            vmem_limit_bytes=32 * 1024 * 1024,
        ),
    )(x_hat_f, x_f)

    result = jnp.sum(per_row_nmse)
    if reduction == "mean":
        result = result / jnp.float32(B)
    return result


def _nmse_ref(x_hat, x, reduction="sum"):
    B = x.shape[0]
    xr = x[:, 0].reshape(B, -1) - 0.5
    xi = x[:, 1].reshape(B, -1) - 0.5
    xhr = x_hat[:, 0].reshape(B, -1) - 0.5
    xhi = x_hat[:, 1].reshape(B, -1) - 0.5
    power = jnp.sum(xr ** 2 + xi ** 2, axis=1)
    mse = jnp.sum((xr - xhr) ** 2 + (xi - xhi) ** 2, axis=1)
    nmse = mse / power
    return jnp.mean(nmse) if reduction == "mean" else jnp.sum(nmse)


if __name__ == "__main__":
    key = jax.random.PRNGKey(0)
    k1, k2, k3, k4 = jax.random.split(key, 4)

    # Case 1: B not a multiple of 8 (ragged-row path), small width (single chunk).
    B, C, H, W = 6, 2, 16, 16
    x = jax.random.uniform(k1, (B, C, H, W), dtype=jnp.float32)
    x_hat = jax.random.uniform(k2, (B, C, H, W), dtype=jnp.float32)
    out_sum = jax.block_until_ready(nmse_loss(x_hat, x, reduction="sum"))
    out_mean = jax.block_until_ready(nmse_loss(x_hat, x, reduction="mean"))
    ref_sum = _nmse_ref(x_hat, x, reduction="sum")
    ref_mean = _nmse_ref(x_hat, x, reduction="mean")
    assert jnp.allclose(out_sum, ref_sum, rtol=1e-5, atol=1e-5), (out_sum, ref_sum)
    assert jnp.allclose(out_mean, ref_mean, rtol=1e-5, atol=1e-5), (out_mean, ref_mean)

    # Case 2: tiny block budget to exercise width tiling with a ragged last width
    # chunk (width=1152 -> w_tile=512, 3 chunks, remainder 128) and a ragged last
    # row block (B=10, tb=8), so both mask paths + the accumulator run.
    B2, H2, W2 = 10, 24, 24
    x2 = jax.random.uniform(k3, (B2, 2, H2, W2), dtype=jnp.float32)
    x_hat2 = jax.random.uniform(k4, (B2, 2, H2, W2), dtype=jnp.float32)
    out2 = jax.block_until_ready(
        nmse_loss(x_hat2, x2, reduction="sum", target_block_bytes=16 * 1024))
    ref2 = _nmse_ref(x_hat2, x2, reduction="sum")
    assert jnp.allclose(out2, ref2, rtol=1e-5, atol=1e-5), (out2, ref2)

    print("KERNEL_OK")
</pallas_src>

<mosaic_0001>
module attributes {stable_mosaic.version = 11 : i64} {
  func.func @_nmse_kernel(%arg0: i32, %arg1: i32, %arg2: memref<8x512xf32, #tpu.memory_space<vmem>>, %arg3: memref<8x512xf32, #tpu.memory_space<vmem>>, %arg4: memref<8x1xf32, #tpu.memory_space<vmem>>, %arg5: memref<8x1xf32, #tpu.memory_space<vmem>>, %arg6: memref<8x1xf32, #tpu.memory_space<vmem>>) attributes {dimension_semantics = [#tpu.dimension_semantics<parallel>, #tpu.dimension_semantics<arbitrary>], iteration_bounds = array<i64: 1, 1>, scalar_prefetch = 0 : i64, scratch_operands = 2 : i64, tpu.core_type = #tpu.core_type<tc>, window_params = [{transform_indices = @transform_0, window_bounds = array<i64: 8, 512>}, {transform_indices = @transform_1, window_bounds = array<i64: 8, 512>}, {transform_indices = @transform_2, window_bounds = array<i64: 8, 1>}]} {
    %c0_i32 = arith.constant 0 : i32
    %0 = arith.cmpi eq, %arg1, %c0_i32 : i32
    %1 = arith.extui %0 : i1 to i32
    %c0_i32_0 = arith.constant 0 : i32
    %2 = arith.cmpi ne, %1, %c0_i32_0 : i32
    scf.if %2 {
      %cst_16 = arith.constant 0.000000e+00 : f32
      %23 = vector.broadcast %cst_16 : f32 to vector<8x1xf32>
      %c0_17 = arith.constant 0 : index
      %c0_18 = arith.constant 0 : index
      %24 = vector.load %arg5[%c0_17, %c0_18] : memref<8x1xf32, #tpu.memory_space<vmem>>, vector<8x1xf32>
      tpu.vector_store %arg5[%c0_17, %c0_18], %23 {strides = array<i32>} : memref<8x1xf32, #tpu.memory_space<vmem>>, vector<8x1xf32>,
      %cst_19 = arith.constant 0.000000e+00 : f32
      %25 = vector.broadcast %cst_19 : f32 to vector<8x1xf32>
      %c0_20 = arith.constant 0 : index
      %c0_21 = arith.constant 0 : index
      %26 = vector.load %arg6[%c0_20, %c0_21] : memref<8x1xf32, #tpu.memory_space<vmem>>, vector<8x1xf32>
      tpu.vector_store %arg6[%c0_20, %c0_21], %25 {strides = array<i32>} : memref<8x1xf32, #tpu.memory_space<vmem>>, vector<8x1xf32>,
    } else {
    }
    %c0 = arith.constant 0 : index
    %c0_1 = arith.constant 0 : index
    %3 = vector.load %arg3[%c0, %c0_1] : memref<8x512xf32, #tpu.memory_space<vmem>>, vector<8x512xf32>
    %c0_2 = arith.constant 0 : index
    %c0_3 = arith.constant 0 : index
    %4 = vector.load %arg2[%c0_2, %c0_3] : memref<8x512xf32, #tpu.memory_space<vmem>>, vector<8x512xf32>
    %cst = arith.constant 5.000000e-01 : f32
    %5 = vector.broadcast %cst : f32 to vector<8x512xf32>
    %6 = arith.subf %3, %5 : vector<8x512xf32>
    %7 = arith.subf %3, %4 : vector<8x512xf32>
    %c0_4 = arith.constant 0 : index
    %c0_5 = arith.constant 0 : index
    %8 = vector.load %arg5[%c0_4, %c0_5] : memref<8x1xf32, #tpu.memory_space<vmem>>, vector<8x1xf32>
    %9 = arith.mulf %6, %6 : vector<8x512xf32>
    %cst_6 = arith.constant dense<0.000000e+00> : vector<8xf32>
    %10 = vector.multi_reduction <add>, %9, %cst_6 [1] : vector<8x512xf32> to vector<8xf32>
    %11 = vector.shape_cast %10 : vector<8xf32> to vector<8x1xf32>
    %12 = arith.addf %8, %11 : vector<8x1xf32>
    %c0_7 = arith.constant 0 : index
    %c0_8 = arith.constant 0 : index
    %13 = vector.load %arg5[%c0_7, %c0_8] : memref<8x1xf32, #tpu.memory_space<vmem>>, vector<8x1xf32>
    tpu.vector_store %arg5[%c0_7, %c0_8], %12 {strides = array<i32>} : memref<8x1xf32, #tpu.memory_space<vmem>>, vector<8x1xf32>,
    %c0_9 = arith.constant 0 : index
    %c0_10 = arith.constant 0 : index
    %14 = vector.load %arg6[%c0_9, %c0_10] : memref<8x1xf32, #tpu.memory_space<vmem>>, vector<8x1xf32>
    %15 = arith.mulf %7, %7 : vector<8x512xf32>
    %cst_11 = arith.constant dense<0.000000e+00> : vector<8xf32>
    %16 = vector.multi_reduction <add>, %15, %cst_11 [1] : vector<8x512xf32> to vector<8xf32>
    %17 = vector.shape_cast %16 : vector<8xf32> to vector<8x1xf32>
    %18 = arith.addf %14, %17 : vector<8x1xf32>
    %c0_12 = arith.constant 0 : index
    %c0_13 = arith.constant 0 : index
    %19 = vector.load %arg6[%c0_12, %c0_13] : memref<8x1xf32, #tpu.memory_space<vmem>>, vector<8x1xf32>
    tpu.vector_store %arg6[%c0_12, %c0_13], %18 {strides = array<i32>} : memref<8x1xf32, #tpu.memory_space<vmem>>, vector<8x1xf32>,
    %c0_i32_14 = arith.constant 0 : i32
    %20 = arith.cmpi eq, %arg1, %c0_i32_14 : i32
    %21 = arith.extui %20 : i1 to i32
    %c0_i32_15 = arith.constant 0 : i32
    %22 = arith.cmpi ne, %21, %c0_i32_15 : i32
    scf.if %22 {
      %c0_16 = arith.constant 0 : index
      %c0_17 = arith.constant 0 : index
      %23 = vector.load %arg6[%c0_16, %c0_17] : memref<8x1xf32, #tpu.memory_space<vmem>>, vector<8x1xf32>
      %c0_18 = arith.constant 0 : index
      %c0_19 = arith.constant 0 : index
      %24 = vector.load %arg5[%c0_18, %c0_19] : memref<8x1xf32, #tpu.memory_space<vmem>>, vector<8x1xf32>
      %25 = arith.divf %23, %24 : vector<8x1xf32>
      %c8_i32 = arith.constant 8 : i32
      %26 = arith.muli %arg0, %c8_i32 : i32
      %27 = tpu.iota {dimensions = array<i32: 0>} : vector<8x1xi32>
      %28 = vector.broadcast %26 : i32 to vector<8x1xi32>
      %29 = arith.addi %28, %27 : vector<8x1xi32>
      %c6_i32 = arith.constant 6 : i32
      %30 = vector.broadcast %c6_i32 : i32 to vector<8x1xi32>
      %31 = arith.cmpi slt, %29, %30 : vector<8x1xi32>
      %cst_20 = arith.constant 0.000000e+00 : f32
      %32 = vector.broadcast %cst_20 : f32 to vector<8x1xf32>
      %33 = arith.select %31, %25, %32 : vector<8x1xi1>, vector<8x1xf32>
      %c0_21 = arith.constant 0 : index
      %c0_22 = arith.constant 0 : index
      %34 = vector.load %arg4[%c0_21, %c0_22] : memref<8x1xf32, #tpu.memory_space<vmem>>, vector<8x1xf32>
      tpu.vector_store %arg4[%c0_21, %c0_22], %33 {strides = array<i32>} : memref<8x1xf32, #tpu.memory_space<vmem>>, vector<8x1xf32>,
    } else {
    }
    return
  }
  func.func @transform_0(%arg0: i32, %arg1: i32) -> (i32, i32) {
    %c0_i32 = arith.constant 0 : i32
    return %arg0, %arg1 : i32, i32
  }
  func.func @transform_1(%arg0: i32, %arg1: i32) -> (i32, i32) {
    %c0_i32 = arith.constant 0 : i32
    return %arg0, %arg1 : i32, i32
  }
  func.func @transform_2(%arg0: i32, %arg1: i32) -> (i32, i32) {
    %c0_i32 = arith.constant 0 : i32
    %c0_i32_0 = arith.constant 0 : i32
    return %arg0, %c0_i32 : i32, i32
  }
}

</mosaic_0001>

<llo_original>
// kernel: tpu_custom_call.1
$region0: #{tpu_custom_call.1}
  #allocation0 [shape = 'u32[]', space=smem, size = 0x4, offset = 0x4, fixed_abs, tag = 'smem constant byte address 0x4 - core index']
  #allocation1 [shape = 'u32[72,128]{1,0:T(1,128)}', space=vmem, size = 0x9000, scoped, tag = 'internal scratch']
  #allocation2 [shape = 'f32[8,1]{1,0:T(8,128)}', space=vmem, size = 0x1000, scoped, tag = 'scratch operand']
  #allocation3 [shape = 'f32[8,1]{1,0:T(8,128)}', space=vmem, size = 0x1000, scoped, tag = 'scratch operand']
  %s0 = inlined_call_operand.hbm [shape: f32[6,512], index: 0, kind: input, shape index: {}]
  %s1 = inlined_call_operand.hbm [shape: f32[6,512], index: 1, kind: input, shape index: {}]
  %s2 = inlined_call_operand.vmem [shape: f32[6,1], index: 2, kind: output, shape index: {}]
  %s3 = sld [smem:[#allocation0]]
  $region34: #{tpu_custom_call.1} parent=0
    _
  %s5 = ssub.s32 1, %s3
  %s6 = scalar_select 0, %s5, %s3
  $region1: #{tpu_custom_call.1} parent=0
    #allocation4 [shape = 'u8[16384]{0}', space=vmem, size = 0x4000, scoped, tag = 'input window, operand 0, single buffered']
    #allocation5 [shape = 's32[1]{0}', space=sflag, size = 0x4, scoped, tag = 'scoped memory for tpu_custom_call.1']
    #allocation6 [shape = 'u8[16384]{0}', space=vmem, size = 0x4000, scoped, tag = 'input window, operand 1, single buffered']
    #allocation7 [shape = 's32[1]{0}', space=sflag, size = 0x4, scoped, tag = 'scoped memory for tpu_custom_call.1']
    %7 = vsyncpa [#allocation5], 0
    %8 = vsyncpa [#allocation7], 0
    // Predicated region
    $region2: #{tpu_custom_call.1} parent=1 // pred_check
      _
    $region3: #{tpu_custom_call.1} parent=1 // pred_check_branch
      %10 = sbr.rel (0) target = $region5
    $region4: #{tpu_custom_call.1} parent=1 // pred_region
      %12 = vsyncadd [#allocation5], 0
      %s14 = sshll.u32 %s0, 4
      %s15 = int_to_ptr.hbm [resolvable:$true] %s14
      %s16 = sshll.u32 [#allocation4], 4
      %s17 = int_to_ptr.vmem [resolvable:$true] %s16
      %19 = dma.hbm_to_vmem [thread:$0]  %s15, 512, %s17, [#allocation5]
    $region5: #{tpu_custom_call.1} parent=1 // pred_fallthru
      _
    // Predicated region
    $region6: #{tpu_custom_call.1} parent=1 // pred_check
      _
    $region7: #{tpu_custom_call.1} parent=1 // pred_check_branch
      %21 = sbr.rel (0) target = $region9
    $region8: #{tpu_custom_call.1} parent=1 // pred_region
      %23 = vsyncadd [#allocation7], 0
      %s25 = sshll.u32 %s1, 4
      %s26 = int_to_ptr.hbm [resolvable:$true] %s25
      %s27 = sshll.u32 [#allocation6], 4
      %s28 = int_to_ptr.vmem [resolvable:$true] %s27
      %30 = dma.hbm_to_vmem [thread:$0]  %s26, 512, %s28, [#allocation7]
    $region9: #{tpu_custom_call.1} parent=1 // pred_fallthru
      _
    // Predicated region
    $region10: #{tpu_custom_call.1} parent=1 // pred_check
      _
    $region11: #{tpu_custom_call.1} parent=1 // pred_check_branch
      %32 = sbr.rel (0) target = $region13
    $region12: #{tpu_custom_call.1} parent=1 // pred_region
      %34 = dma.done [#allocation5], 512
    $region13: #{tpu_custom_call.1} parent=1 // pred_fallthru
      _
    // Predicated region
    $region14: #{tpu_custom_call.1} parent=1 // pred_check
      _
    $region15: #{tpu_custom_call.1} parent=1 // pred_check_branch
      %36 = sbr.rel (0) target = $region17
    $region16: #{tpu_custom_call.1} parent=1 // pred_region
      %38 = dma.done [#allocation7], 512
    $region17: #{tpu_custom_call.1} parent=1 // pred_fallthru
      _
    %p39 = scmp.eq.s32.totalorder 0, 0
    // Predicated region
    $region18: #{tpu_custom_call.1} parent=1 // pred_check
      %p40 = pneg %p39
    $region19: #{tpu_custom_call.1} parent=1 // pred_check_branch
      %42 = sbr.rel (%p40) target = $region21
    $region20: #{tpu_custom_call.1} parent=1 // pred_region
      %vm43 = vcmask 7168
      %44 = vst.msk [vmem:[#allocation2] sm:$0xff] %vm43, 0.0
      %45 = vst.msk [vmem:[#allocation3] sm:$0xff] %vm43, 0.0
    $region21: #{tpu_custom_call.1} parent=1 // pred_fallthru
      _
    %v46 = vld [vmem:[#allocation6] sm:$0xff]
    %v47 = vld [vmem:[#allocation6 + $0x8] sm:$0xff]
    %v48 = vld [vmem:[#allocation6 + $0x10] sm:$0xff]
    %v49 = vld [vmem:[#allocation6 + $0x18] sm:$0xff]
    %v50 = vld [vmem:[#allocation4] sm:$0xff]
    %v51 = vld [vmem:[#allocation4 + $0x8] sm:$0xff]
    %v52 = vld [vmem:[#allocation4 + $0x10] sm:$0xff]
    %v53 = vld [vmem:[#allocation4 + $0x18] sm:$0xff]
    %v54 = vsub.f32 %v46, 0.5
    %v55 = vsub.f32 %v47, 0.5
    %v56 = vsub.f32 %v48, 0.5
    %v57 = vsub.f32 %v49, 0.5
    %v58 = vsub.f32 %v46, %v50
    %v59 = vsub.f32 %v47, %v51
    %v60 = vsub.f32 %v48, %v52
    %v61 = vsub.f32 %v49, %v53
    %v62 = vld [vmem:[#allocation2] sm:$0xff]
    %v63 = vmul.f32 %v54, %v54
    %v64 = vmul.f32 %v55, %v55
    %v65 = vmul.f32 %v56, %v56
    %v66 = vmul.f32 %v57, %v57
    %v67 = vadd.f32 %v63, %v64
    %v68 = vadd.f32 %v67, %v65
    %v69 = vadd.f32 %v68, %v66
    %70 = vadd.xlane.f32.xlu0 %v69
    %v71 = vpop.xlane.xlu0 %70
    %v72 = vadd.f32 %v62, %v71
    %vm73 = vcmask 7168
    %74 = vst.msk [vmem:[#allocation2] sm:$0xff] %vm73, %v72
    %v75 = vld [vmem:[#allocation3] sm:$0xff]
    %v76 = vmul.f32 %v58, %v58
    %v77 = vmul.f32 %v59, %v59
    %v78 = vmul.f32 %v60, %v60
    %v79 = vmul.f32 %v61, %v61
    %v80 = vadd.f32 %v76, %v77
    %v81 = vadd.f32 %v80, %v78
    %v82 = vadd.f32 %v81, %v79
    %83 = vadd.xlane.f32.xlu0 %v82
    %v84 = vpop.xlane.xlu0 %83
    %v85 = vadd.f32 %v75, %v84
    %86 = vst.msk [vmem:[#allocation3] sm:$0xff] %vm73, %v85
    // Predicated region
    $region22: #{tpu_custom_call.1} parent=1 // pred_check
      %p87 = pneg %p39
    $region23: #{tpu_custom_call.1} parent=1 // pred_check_branch
      %89 = sbr.rel (%p87) target = $region25
    $region24: #{tpu_custom_call.1} parent=1 // pred_region
      %v90 = vld [vmem:[#allocation3] sm:$0xff]
      %v91 = vld [vmem:[#allocation2] sm:$0xff]
      %v92 = vrcp.pop %v91
      %v93 = vmul.f32 %v91, %v92
      %v94 = vsub.f32 1.0, %v93
      %v95 = vmul.f32 %v92, %v94
      %v96 = vadd.f32 %v92, %v95
      %vm97 = vweird.f32 %v91
      %vm98 = vweird.f32 %v92
      %vm99 = vmor %vm97, %vm98
      %v100 = vsel %vm99, %v92, %v96
      %v101 = vand.u32 2147483647, %v91
      %vm102 = vcmp.eq.f32.partialorder %v101, 8.507059e+37
      %v103 = vand.u32 %v91, 2147483648
      %v104 = vor.u32 1.1754944e-38, %v103
      %v105 = vsel %vm102, %v104, %v100
      %v106 = vmul.f32 %v90, %v105
      %s107 = smul.u32 0, 8
      %v108 = vlaneseq
      %v109 = vshrl.u32 %v108, 7
      %v110 = vstv %s107
      %v111 = vadd.s32 %v110, %v109
      %vm112 = vcmp.lt.s32.totalorder %v111, 6
      %v113 = vsel %vm112, %v106, 0.0
      %114 = vst.msk [vmem:[%s2] sm:$0xff] %vm73, %v113
    $region25: #{tpu_custom_call.1} parent=1 // pred_fallthru
      _
    // Predicated region
    $region26: #{tpu_custom_call.1} parent=1 // pred_check
      _
    $region27: #{tpu_custom_call.1} parent=1 // pred_check_branch
      %116 = sbr.rel (0) target = $region29
    $region28: #{tpu_custom_call.1} parent=1 // pred_region
      _
    $region29: #{tpu_custom_call.1} parent=1 // pred_fallthru
      _
    // Predicated region
    $region30: #{tpu_custom_call.1} parent=1 // pred_check
      _
    $region31: #{tpu_custom_call.1} parent=1 // pred_check_branch
      %118 = sbr.rel (0) target = $region33
    $region32: #{tpu_custom_call.1} parent=1 // pred_region
      _
    $region33: #{tpu_custom_call.1} parent=1 // pred_fallthru
      _
    %119 = vsyncpa [#allocation5], 1
    %120 = vsyncpa [#allocation7], 1

</llo_original>
